<compile_context>
chip_gen: v7x
topology: tpu7x:2x2x1
jax: 0.10.0
libtpu: 0.0.40
codegen_flags: <defaults>
</compile_context>

<pallas_src>
import jax
import jax.numpy as jnp
from jax.experimental import pallas as pl
from jax.experimental.pallas import tpu as pltpu  # noqa: F401

# ---- config (matches config.emb_dim / config.hidden_dim of the module) ----
EMB_DIM = 32
HIDDEN_DIM = 16
H2 = 2 * HIDDEN_DIM            # hidden_dim * 2 = 32
BATCH = 2
SRC_LEN = 8


def _encoder_attention_kernel(h_ref, w_ref, dyn_ref, out_ref):
    """Single step: the whole batch lives in VMEM.

    h_ref:   (B, L, E)          encoder hidden states
    w_ref:   (E + 2H + 2, 2H)   packed [W_h^T ; W_s^T ; b_s ; v]  (batch-free)
    dyn_ref: (B, 2H + L)        packed [st_hat | enc_padding_mask]
    out_ref: (B, E + L)         packed [ct_e | at]  (single output DMA)
    """
    B, L, E = h_ref.shape
    h2 = w_ref.shape[1]

    h3 = h_ref[...]                                  # (B, L, E)
    w = w_ref[...]                                   # (E+2H+2, 2H)
    whT = w[0:E, :]                                  # (E, 2H)
    wsT = w[E:E + h2, :]                             # (2H, 2H)
    bs = w[E + h2:E + h2 + 1, :]                     # (1, 2H)
    v = w[E + h2 + 1:E + h2 + 2, :]                  # (1, 2H)
    st = dyn_ref[:, 0:h2]                            # (B, 2H)
    mask = dyn_ref[:, h2:h2 + L]                     # (B, L)

    # et = W_h(h): batch collapsed into rows -> one (B*L, E) @ (E, 2H) MXU pass.
    et = jnp.dot(h3.reshape(B * L, E), whT,
                 preferred_element_type=jnp.float32)           # (B*L, 2H)
    # dec_fea = W_s(st_hat) + b: one (B, 2H) @ (2H, 2H) MXU pass.
    dec = jnp.dot(st, wsT, preferred_element_type=jnp.float32) + bs  # (B, 2H)

    # et = tanh(et + dec_fea)   (dec broadcast over L)
    t = jnp.tanh(et.reshape(B, L, h2) + dec[:, None, :])       # (B, L, 2H)

    # scores[b, l] = v . t[b, l, :]   (VPU mul + XLU lane-reduce; lands lane-dense (B, L))
    scores = jnp.sum(t * v, axis=-1)                            # (B, L)

    # Fused softmax (over L) + mask renormalization — algebraically identical to
    # softmax(scores) * mask / sum(softmax(scores) * mask).
    m = jnp.max(scores, axis=-1, keepdims=True)
    e = jnp.exp(scores - m) * mask
    # NOTE: like the PyTorch module, an all-zero mask row yields inf/NaN here.
    inv = pl.reciprocal(jnp.sum(e, axis=-1, keepdims=True), approx=False)
    at = e * inv                                                 # (B, L)

    # ct_e = bmm(at, h)  — genuinely batched (h differs per batch element).
    ct = jnp.einsum('bkl,ble->bke', at[:, None, :], h3,
                    preferred_element_type=jnp.float32)[:, 0, :]  # (B, E)

    out_ref[:, 0:E] = ct
    out_ref[:, E:E + L] = at


def pack_encoder_attention_params(params):
    """Precompute the packed weight slab ONCE (pure function of the params)."""
    h2 = params["W_s_w"].shape[0]
    whT = params["W_h_w"].T                               # (E, 2H)
    wsT = params["W_s_w"].T                               # (2H, 2H)
    bs = params["W_s_b"].reshape(1, h2)                   # (1, 2H)
    v = params["v_w"].reshape(1, h2)                      # (1, 2H)
    return jnp.concatenate([whT, wsT, bs, v], axis=0)     # (E+2H+2, 2H)


def encoder_attention_forward(st_hat, h, enc_padding_mask,
                              sum_temporal_srcs, sum_k_emb, w_pack):
    """Mirrors encoder_attention.forward. Returns (ct_e, at, sum_temporal_srcs)."""
    del sum_k_emb  # unused by the PyTorch forward as well
    B, L, E = h.shape

    # One small per-call pack (st_hat | mask) -> one input DMA instead of two.
    dyn = jnp.concatenate([st_hat, enc_padding_mask], axis=1)   # (B, 2H + L)

    # Whole problem fits trivially in VMEM -> single step, no grid, full-array
    # blocks (default BlockSpecs).  For large B, add a batch-block grid axis with
    # dimension_semantics=("parallel",) so v7x's two TensorCores split the batch.
    out = pl.pallas_call(
        _encoder_attention_kernel,
        out_shape=jax.ShapeDtypeStruct((B, E + L), jnp.float32),
    )(h, w_pack, dyn)

    return out[:, :E], out[:, E:E + L], sum_temporal_srcs


def _reference_forward(st_hat, h, enc_padding_mask, sum_temporal_srcs, params):
    """Plain-JAX reference mirroring the PyTorch forward, for a sanity check."""
    et = h @ params["W_h_w"].T
    dec = st_hat @ params["W_s_w"].T + params["W_s_b"]
    et = jnp.tanh(et + dec[:, None, :])
    et = (et @ params["v_w"].T)[..., 0]
    et1 = jax.nn.softmax(et, axis=1)
    at = et1 * enc_padding_mask
    at = at / jnp.sum(at, axis=1, keepdims=True)
    ct_e = jnp.einsum("bl,ble->be", at, h)
    return ct_e, at, sum_temporal_srcs


if __name__ == "__main__":
    key = jax.random.PRNGKey(0)
    k1, k2, k3, k4, k5, k6, k7 = jax.random.split(key, 7)

    # Deterministic parameter init (torch Linear layout: weight is (out, in)).
    params = {
        "W_h_w": jax.random.normal(k1, (H2, EMB_DIM), jnp.float32) * 0.1,
        "W_s_w": jax.random.normal(k2, (H2, H2), jnp.float32) * 0.1,
        "W_s_b": jax.random.normal(k3, (H2,), jnp.float32) * 0.1,
        "v_w":   jax.random.normal(k4, (1, H2), jnp.float32) * 0.1,
        # TODO(synk): W_t is declared in the PyTorch __init__ but unused in forward; omitted.
    }
    # Packed weight slab precomputed once (hoisted out of the per-call path).
    w_pack = pack_encoder_attention_params(params)

    st_hat = jax.random.normal(k5, (BATCH, H2), jnp.float32)
    h = jax.random.normal(k6, (BATCH, SRC_LEN, EMB_DIM), jnp.float32)
    # padding mask: first 6 positions valid, last 2 padded
    enc_padding_mask = jnp.concatenate(
        [jnp.ones((BATCH, 6), jnp.float32), jnp.zeros((BATCH, 2), jnp.float32)],
        axis=1)
    sum_temporal_srcs = jax.random.normal(k7, (BATCH, SRC_LEN), jnp.float32)
    sum_k_emb = None

    ct_e, at, sts = encoder_attention_forward(
        st_hat, h, enc_padding_mask, sum_temporal_srcs, sum_k_emb, w_pack)
    jax.block_until_ready((ct_e, at, sts))

    ct_ref, at_ref, _ = _reference_forward(
        st_hat, h, enc_padding_mask, sum_temporal_srcs, params)
    assert jnp.allclose(ct_e, ct_ref, atol=1e-4, rtol=1e-4)
    assert jnp.allclose(at, at_ref, atol=1e-4, rtol=1e-4)
    assert jnp.array_equal(sts, sum_temporal_srcs)

    print("KERNEL_OK")
</pallas_src>

<mosaic_0001>
module attributes {stable_mosaic.version = 11 : i64} {
  func.func @_encoder_attention_kernel(%arg0: memref<2x8x32xf32, #tpu.memory_space<vmem>>, %arg1: memref<66x32xf32, #tpu.memory_space<vmem>>, %arg2: memref<2x40xf32, #tpu.memory_space<vmem>>, %arg3: memref<2x40xf32, #tpu.memory_space<vmem>>) attributes {dimension_semantics = [], scalar_prefetch = 0 : i64, scratch_operands = 0 : i64, tpu.core_type = #tpu.core_type<tc>} {
    %c0 = arith.constant 0 : index
    %c0_0 = arith.constant 0 : index
    %c0_1 = arith.constant 0 : index
    %0 = vector.load %arg0[%c0, %c0_0, %c0_1] : memref<2x8x32xf32, #tpu.memory_space<vmem>>, vector<2x8x32xf32>
    %c0_2 = arith.constant 0 : index
    %c0_3 = arith.constant 0 : index
    %1 = vector.load %arg1[%c0_2, %c0_3] : memref<66x32xf32, #tpu.memory_space<vmem>>, vector<66x32xf32>
    %2 = vector.extract_strided_slice %1 {offsets = [0, 0], sizes = [32, 32], strides = [1, 1]} : vector<66x32xf32> to vector<32x32xf32>
    %3 = vector.extract_strided_slice %1 {offsets = [32, 0], sizes = [32, 32], strides = [1, 1]} : vector<66x32xf32> to vector<32x32xf32>
    %4 = vector.extract_strided_slice %1 {offsets = [64, 0], sizes = [1, 32], strides = [1, 1]} : vector<66x32xf32> to vector<1x32xf32>
    %5 = vector.extract_strided_slice %1 {offsets = [65, 0], sizes = [1, 32], strides = [1, 1]} : vector<66x32xf32> to vector<1x32xf32>
    %c0_4 = arith.constant 0 : index
    %c0_5 = arith.constant 0 : index
    %6 = vector.load %arg2[%c0_4, %c0_5] : memref<2x40xf32, #tpu.memory_space<vmem>>, vector<2x32xf32>
    %c0_6 = arith.constant 0 : index
    %c32 = arith.constant 32 : index
    %7 = vector.load %arg2[%c0_6, %c32] : memref<2x40xf32, #tpu.memory_space<vmem>>, vector<2x8xf32>
    %8 = vector.shape_cast %0 : vector<2x8x32xf32> to vector<16x32xf32>
    %cst = arith.constant dense<0.000000e+00> : vector<16x32xf32>
    %9 = tpu.matmul %8, %2, %cst {dimension_numbers = #tpu.dot_dimension_numbers<[1], [0], [0], [1], [0, 0, 1, 1], [], []>} : vector<16x32xf32>, vector<32x32xf32>, vector<16x32xf32> -> vector<16x32xf32>
    %cst_7 = arith.constant dense<0.000000e+00> : vector<2x32xf32>
    %10 = tpu.matmul %6, %3, %cst_7 {dimension_numbers = #tpu.dot_dimension_numbers<[1], [0], [0], [1], [0, 0, 1, 1], [], []>} : vector<2x32xf32>, vector<32x32xf32>, vector<2x32xf32> -> vector<2x32xf32>
    %11 = vector.broadcast %4 : vector<1x32xf32> to vector<2x32xf32>
    %12 = arith.addf %10, %11 : vector<2x32xf32>
    %13 = vector.shape_cast %9 : vector<16x32xf32> to vector<2x8x32xf32>
    %14 = vector.shape_cast %12 : vector<2x32xf32> to vector<2x1x32xf32>
    %15 = vector.broadcast %14 : vector<2x1x32xf32> to vector<2x8x32xf32>
    %16 = arith.addf %13, %15 : vector<2x8x32xf32>
    %17 = math.tanh %16 : vector<2x8x32xf32>
    %18 = vector.shape_cast %5 : vector<1x32xf32> to vector<1x1x32xf32>
    %19 = vector.broadcast %18 : vector<1x1x32xf32> to vector<2x8x32xf32>
    %20 = arith.mulf %17, %19 : vector<2x8x32xf32>
    %cst_8 = arith.constant dense<0.000000e+00> : vector<2x8xf32>
    %21 = vector.multi_reduction <add>, %20, %cst_8 [2] : vector<2x8x32xf32> to vector<2x8xf32>
    %cst_9 = arith.constant dense<0xFF800000> : vector<2xf32>
    %22 = vector.multi_reduction <maximumf>, %21, %cst_9 [1] : vector<2x8xf32> to vector<2xf32>
    %23 = vector.shape_cast %22 : vector<2xf32> to vector<2x1xf32>
    %24 = vector.broadcast %23 : vector<2x1xf32> to vector<2x8xf32>
    %25 = arith.subf %21, %24 : vector<2x8xf32>
    %26 = math.exp %25 : vector<2x8xf32>
    %27 = arith.mulf %26, %7 : vector<2x8xf32>
    %cst_10 = arith.constant dense<0.000000e+00> : vector<2xf32>
    %28 = vector.multi_reduction <add>, %27, %cst_10 [1] : vector<2x8xf32> to vector<2xf32>
    %29 = vector.shape_cast %28 : vector<2xf32> to vector<2x1xf32>
    %30 = tpu.reciprocal %29 : vector<2x1xf32> -> vector<2x1xf32>
    %31 = vector.broadcast %30 : vector<2x1xf32> to vector<2x8xf32>
    %32 = arith.mulf %27, %31 : vector<2x8xf32>
    %33 = vector.shape_cast %32 : vector<2x8xf32> to vector<2x1x8xf32>
    "tpu.trace_start"() <{level = 10 : i32, message = "bkl,ble->bke"}> : () -> ()
    %cst_11 = arith.constant dense<0.000000e+00> : vector<2x1x32xf32>
    %34 = tpu.matmul %33, %0, %cst_11 {dimension_numbers = #tpu.dot_dimension_numbers<[2], [1], [1], [2], [0, 0, 0, 1, 1, 2], [0], [0]>} : vector<2x1x8xf32>, vector<2x8x32xf32>, vector<2x1x32xf32> -> vector<2x1x32xf32>
    "tpu.trace_stop"() : () -> ()
    %35 = vector.shape_cast %34 : vector<2x1x32xf32> to vector<2x32xf32>
    %c0_12 = arith.constant 0 : index
    %c0_13 = arith.constant 0 : index
    %36 = vector.load %arg3[%c0_12, %c0_13] : memref<2x40xf32, #tpu.memory_space<vmem>>, vector<2x32xf32>
    tpu.vector_store %arg3[%c0_12, %c0_13], %35 {strides = array<i32>} : memref<2x40xf32, #tpu.memory_space<vmem>>, vector<2x32xf32>,
    %c0_14 = arith.constant 0 : index
    %c32_15 = arith.constant 32 : index
    %37 = vector.load %arg3[%c0_14, %c32_15] : memref<2x40xf32, #tpu.memory_space<vmem>>, vector<2x8xf32>
    tpu.vector_store %arg3[%c0_14, %c32_15], %32 {strides = array<i32>} : memref<2x40xf32, #tpu.memory_space<vmem>>, vector<2x8xf32>,
    return
  }
}

</mosaic_0001>

<llo_original>
// kernel: tpu_custom_call.1
$region0: #{tpu_custom_call.1}
  #allocation0 [shape = 'u32[]', space=smem, size = 0x4, offset = 0x4, fixed_abs, tag = 'smem constant byte address 0x4 - core index']
  #allocation1 [shape = 'u32[144,128]{1,0:T(1,128)}', space=vmem, size = 0x12000, scoped, tag = 'internal scratch']
  %s0 = inlined_call_operand.vmem [shape: f32[2,8,32], index: 0, kind: input, shape index: {}]
  %s1 = inlined_call_operand.vmem [shape: f32[66,32], index: 1, kind: input, shape index: {}]
  %s2 = inlined_call_operand.vmem [shape: f32[2,40], index: 2, kind: input, shape index: {}]
  %s3 = inlined_call_operand.hbm [shape: f32[2,40], index: 3, kind: output, shape index: {}]
  %s4 = sld [smem:[#allocation0]]
  $region22: #{tpu_custom_call.1} parent=0
    _
  %s6 = ssub.s32 1, %s4
  %s7 = scalar_select 0, %s6, %s4
  $region1: #{tpu_custom_call.1} parent=0
    #allocation2 [shape = 'u8[1024]{0}', space=vmem, size = 0x400, scoped, tag = 'output window, operand 0, single buffered']
    #allocation3 [shape = 's32[1]{0}', space=sflag, size = 0x4, scoped, tag = 'scoped memory for tpu_custom_call.1']
    %8 = vsyncpa [#allocation3], 0
    // Predicated region
    $region2: #{tpu_custom_call.1} parent=1 // pred_check
      _
    $region3: #{tpu_custom_call.1} parent=1 // pred_check_branch
      %10 = sbr.rel (0) target = $region5
    $region4: #{tpu_custom_call.1} parent=1 // pred_region
      _
    $region5: #{tpu_custom_call.1} parent=1 // pred_fallthru
      _
    // Predicated region
    $region6: #{tpu_custom_call.1} parent=1 // pred_check
      _
    $region7: #{tpu_custom_call.1} parent=1 // pred_check_branch
      %12 = sbr.rel (0) target = $region9
    $region8: #{tpu_custom_call.1} parent=1 // pred_region
      _
    $region9: #{tpu_custom_call.1} parent=1 // pred_fallthru
      _
    // Predicated region
    $region10: #{tpu_custom_call.1} parent=1 // pred_check
      _
    $region11: #{tpu_custom_call.1} parent=1 // pred_check_branch
      %14 = sbr.rel (0) target = $region13
    $region12: #{tpu_custom_call.1} parent=1 // pred_region
      _
    $region13: #{tpu_custom_call.1} parent=1 // pred_fallthru
      _
    %v15 = vld [vmem:[%s0] sm:$0xff]
    %v16 = vld [vmem:[%s0 + $0x8] sm:$0xff]
    %v17 = vld [vmem:[%s1] sm:$0xff]
    %v18 = vld [vmem:[%s1 + $0x8] sm:$0xff]
    %v19 = vld [vmem:[%s1 + $0x10] sm:$0xff]
    %v20 = vld [vmem:[%s1 + $0x18] sm:$0xff]
    %v21 = vld [vmem:[%s1 + $0x20] sm:$0xff]
    %v22 = vld [vmem:[%s1 + $0x28] sm:$0xff]
    %v23 = vld [vmem:[%s1 + $0x30] sm:$0xff]
    %v24 = vld [vmem:[%s1 + $0x38] sm:$0xff]
    %v25 = vld [vmem:[%s1 + $0x40] sm:$0x3]
    %v26 = vld [vmem:[%s2] sm:$0x3]
    %vm27 = vcmask 261120
    %v29 = vsel %vm27, %v15, 0
    %v32 = vsel %vm27, %v16, 0
    %34 = vmatprep.subr.mxu0 0.0
    %35 = vmatpush1.msra.mxu0 %v17
    %36 = vmatprep.subr.mxu0 0.0
    %37 = vmatpush1.msra.mxu0 %v18
    %38 = vmatprep.subr.mxu0 0.0
    %39 = vmatpush1.msra.mxu0 %v19
    %40 = vmatprep.subr.mxu0 0.0
    %41 = vmatpush1.msra.mxu0 %v20
    %42 = vmatprep.subr.mxu0 0.0
    %43 = vmatpush1.msra.mxu0 0.0
    %44 = vmatprep.subr.mxu0 0.0
    %45 = vmatpush1.msra.mxu0 0.0
    %46 = vmatprep.subr.mxu0 0.0
    %47 = vmatpush1.msra.mxu0 0.0
    %48 = vmatprep.subr.mxu0 0.0
    %49 = vmatpush1.msra.mxu0 0.0
    %50 = vmatprep.subr.mxu0 0.0
    %51 = vmatpush1.msra.mxu0 0.0
    %52 = vmatprep.subr.mxu0 0.0
    %53 = vmatpush1.msra.mxu0 0.0
    %54 = vmatprep.subr.mxu0 0.0
    %55 = vmatpush1.msra.mxu0 0.0
    %56 = vmatprep.subr.mxu0 0.0
    %57 = vmatpush1.msra.mxu0 0.0
    %58 = vmatprep.subr.mxu0 0.0
    %59 = vmatpush1.msra.mxu0 0.0
    %60 = vmatprep.subr.mxu0 0.0
    %61 = vmatpush1.msra.mxu0 0.0
    %62 = vmatprep.subr.mxu0 0.0
    %63 = vmatpush1.msra.mxu0 0.0
    %64 = vmatprep.subr.mxu0 0.0
    %65 = vmatpush1.msra.mxu0 0.0
    %66 = vmatprep.subr.mxu0 0.0
    %67 = vmatpush1.msra.mxu0 0.0
    %68 = vmatprep.subr.mxu0 0.0
    %69 = vmatpush1.msra.mxu0 0.0
    %70 = vmatprep.subr.mxu0 0.0
    %71 = vmatpush1.msra.mxu0 0.0
    %72 = vmatprep.subr.mxu0 0.0
    %73 = vmatpush1.msra.mxu0 0.0
    %74 = vmatprep.subr.mxu0 0.0
    %75 = vmatpush1.msra.mxu0 0.0
    %76 = vmatprep.subr.mxu0 0.0
    %77 = vmatpush1.msra.mxu0 0.0
    %78 = vmatprep.subr.mxu0 0.0
    %79 = vmatpush1.msra.mxu0 0.0
    %80 = vmatprep.subr.mxu0 0.0
    %81 = vmatpush1.msra.mxu0 0.0
    %82 = vmatprep.subr.mxu0 0.0
    %83 = vmatpush1.msra.mxu0 0.0
    %84 = vmatprep.subr.mxu0 0.0
    %85 = vmatpush1.msra.mxu0 0.0
    %86 = vmatprep.subr.mxu0 0.0
    %87 = vmatpush1.msra.mxu0 0.0
    %88 = vmatprep.subr.mxu0 0.0
    %89 = vmatpush1.msra.mxu0 0.0
    %90 = vmatprep.subr.mxu0 0.0
    %91 = vmatpush1.msra.mxu0 0.0
    %92 = vmatprep.subr.mxu0 0.0
    %93 = vmatpush1.msra.mxu0 0.0
    %94 = vmatprep.subr.mxu0 0.0
    %95 = vmatpush1.msra.mxu0 0.0
    %96 = vmatprep.subr.mxu0 0.0
    %97 = vmatpush1.msra.mxu0 0.0
    %98 = vmatprep.mubr.f32.mxu0 0.0
    %99 = vmatmul.mubr.f32.gmra.mrb[0].mxu0 %v29
    %v100 = vpop.f32.mrb[0].mxu0
    %v101 = vadd.f32 0.0, %v100
    %v102 = vpop.f32.mrb[0].mxu0
    %103 = vmatprep.mubr.f32.mxu0 0.0
    %104 = vmatmul.mubr.f32.gmra.mrb[0].mxu0 %v32
    %v105 = vpop.f32.mrb[0].mxu0
    %v106 = vadd.f32 0.0, %v105
    %v107 = vpop.f32.mrb[0].mxu0
    %108 = vdwg.mxu0
    %v109 = vlaneseq
    %v110 = vshrl.u32 %v109, 7
    %v111 = vsub.s32 0, %v110
    %v112 = vrot.slane %v25, %v111
    %v114 = vsel %vm27, %v26, 0
    %116 = vmatprep.subr.mxu0 0.0
    %117 = vmatpush1.msra.mxu0 %v21
    %118 = vmatprep.subr.mxu0 0.0
    %119 = vmatpush1.msra.mxu0 %v22
    %120 = vmatprep.subr.mxu0 0.0
    %121 = vmatpush1.msra.mxu0 %v23
    %122 = vmatprep.subr.mxu0 0.0
    %123 = vmatpush1.msra.mxu0 %v24
    %124 = vmatprep.subr.mxu0 0.0
    %125 = vmatpush1.msra.mxu0 0.0
    %126 = vmatprep.subr.mxu0 0.0
    %127 = vmatpush1.msra.mxu0 0.0
    %128 = vmatprep.subr.mxu0 0.0
    %129 = vmatpush1.msra.mxu0 0.0
    %130 = vmatprep.subr.mxu0 0.0
    %131 = vmatpush1.msra.mxu0 0.0
    %132 = vmatprep.subr.mxu0 0.0
    %133 = vmatpush1.msra.mxu0 0.0
    %134 = vmatprep.subr.mxu0 0.0
    %135 = vmatpush1.msra.mxu0 0.0
    %136 = vmatprep.subr.mxu0 0.0
    %137 = vmatpush1.msra.mxu0 0.0
    %138 = vmatprep.subr.mxu0 0.0
    %139 = vmatpush1.msra.mxu0 0.0
    %140 = vmatprep.subr.mxu0 0.0
    %141 = vmatpush1.msra.mxu0 0.0
    %142 = vmatprep.subr.mxu0 0.0
    %143 = vmatpush1.msra.mxu0 0.0
    %144 = vmatprep.subr.mxu0 0.0
    %145 = vmatpush1.msra.mxu0 0.0
    %146 = vmatprep.subr.mxu0 0.0
    %147 = vmatpush1.msra.mxu0 0.0
    %148 = vmatprep.subr.mxu0 0.0
    %149 = vmatpush1.msra.mxu0 0.0
    %150 = vmatprep.subr.mxu0 0.0
    %151 = vmatpush1.msra.mxu0 0.0
    %152 = vmatprep.subr.mxu0 0.0
    %153 = vmatpush1.msra.mxu0 0.0
    %154 = vmatprep.subr.mxu0 0.0
    %155 = vmatpush1.msra.mxu0 0.0
    %156 = vmatprep.subr.mxu0 0.0
    %157 = vmatpush1.msra.mxu0 0.0
    %158 = vmatprep.subr.mxu0 0.0
    %159 = vmatpush1.msra.mxu0 0.0
    %160 = vmatprep.subr.mxu0 0.0
    %161 = vmatpush1.msra.mxu0 0.0
    %162 = vmatprep.subr.mxu0 0.0
    %163 = vmatpush1.msra.mxu0 0.0
    %164 = vmatprep.subr.mxu0 0.0
    %165 = vmatpush1.msra.mxu0 0.0
    %166 = vmatprep.subr.mxu0 0.0
    %167 = vmatpush1.msra.mxu0 0.0
    %168 = vmatprep.subr.mxu0 0.0
    %169 = vmatpush1.msra.mxu0 0.0
    %170 = vmatprep.subr.mxu0 0.0
    %171 = vmatpush1.msra.mxu0 0.0
    %172 = vmatprep.subr.mxu0 0.0
    %173 = vmatpush1.msra.mxu0 0.0
    %174 = vmatprep.subr.mxu0 0.0
    %175 = vmatpush1.msra.mxu0 0.0
    %176 = vmatprep.subr.mxu0 0.0
    %177 = vmatpush1.msra.mxu0 0.0
    %178 = vmatprep.subr.mxu0 0.0
    %179 = vmatpush1.msra.mxu0 0.0
    %180 = vmatprep.mubr.f32.mxu0 0.0
    %181 = vmatmul.mubr.f32.gmra.mrb[0].mxu0 %v114
    %v182 = vpop.f32.mrb[0].mxu0
    %v183 = vadd.f32 %v112, %v182
    %v184 = vpop.f32.mrb[0].mxu0
    %185 = vdwg.mxu0
    %v188 = vunpack.c.l.s4 1966171168
    %v189 = vunpack.c.0.s8 %v188
    %v190 = vlaneseq
    %v191 = vshrl.u32 %v190, 7
    %v192 = vsub.s32 %v189, %v191
    %v193 = vrot.slane %v183, %v192
    %v194 = vcombine.high %v193, %v193
    %v196 = vunpack.c.l.s4 1966171168
    %v197 = vunpack.c.0.s8 %v196
    %v198 = vlaneseq
    %v199 = vshrl.u32 %v198, 7
    %v200 = vsub.s32 %v197, %v199
    %v201 = vrot.slane %v193, %v200
    %v203 = vunpack.c.l.s4 1966171168
    %v204 = vunpack.c.0.s8 %v203
    %v205 = vlaneseq
    %v206 = vshrl.u32 %v205, 7
    %v207 = vsub.s32 %v204, %v206
    %v208 = vrot.slane %v194, %v207
    %v209 = vlaneseq
    %v210 = vshrl.u32 %v209, 7
    %v211 = vsub.s32 0, %v210
    %v212 = vrot.slane %v201, %v211
    %v213 = vlaneseq
    %v214 = vshrl.u32 %v213, 7
    %v215 = vsub.s32 0, %v214
    %v216 = vrot.slane %v208, %v215
    %v219 = vadd.f32 %v101, %v212
    %v220 = vadd.f32 %v106, %v216
    %v221 = vtanh.pop %v219
    %v222 = vtanh.pop %v220
    %v223 = vlaneseq
    %v224 = vshrl.u32 %v223, 7
    %v225 = vsub.s32 1, %v224
    %v226 = vrot.slane %v25, %v225
    %v227 = vmul.f32 %v221, %v226
    %v228 = vmul.f32 %v222, %v226
    %v229 = vsel %vm27, %v227, 0.0
    %230 = vadd.xlane.f32.xlu0 %v229
    %v231 = vpop.xlane.xlu0 %230
    %v232 = vsel %vm27, %v228, 0.0
    %233 = vadd.xlane.f32.xlu0 %v232
    %v234 = vpop.xlane.xlu0 %233
    %v237 = vlaneseq
    %v238 = vand.u32 %v237, 127
    %v239 = vlaneseq
    %v240 = vshrl.u32 %v239, 7
    %v241 = vsub.s32 %v238, %v240
    %v242 = vrot.slane %v231, %v241
    %v243 = vlaneseq
    %v244 = vshrl.u32 %v243, 7
    %v245 = vsub.s32 %v238, %v244
    %v246 = vrot.slane %v234, %v245
    %vm247 = vcmask 1041409
    %v248 = vsel %vm247, %v246, %v242
    %vm250 = vcmask 58368
    %v251 = vsel %vm250, %v248, -inf
    %252 = vmax.xlane.f32.xlu0 %v251
    %v253 = vpop.xlane.xlu0 %252
    %v255 = vlaneseq
    %v256 = vshrl.u32 %v255, 7
    %v257 = vsub.s32 0, %v256
    %v258 = vrot.slane %v253, %v257
    %v259 = vlaneseq
    %v260 = vshrl.u32 %v259, 7
    %v261 = vsub.s32 1, %v260
    %v262 = vrot.slane %v253, %v261
    %v265 = vsub.f32 %v231, %v258
    %v266 = vsub.f32 %v234, %v262
    %v267 = vmul.f32 %v265, 1.442695
    %v268 = vpow.pop %v267
    %v269 = vmul.f32 %v266, 1.442695
    %v270 = vpow.pop %v269
    %v271 = vlaneseq
    %v272 = vshrl.u32 %v271, 7
    %v273 = vsub.s32 0, %v272
    %v274 = vrot.slane %v26, %v273
    %s276 = sor.u32 256, 32
    %277 = vbcast.lane.b32.xlu0 %v274, %s276
    %v278 = vpop.permute.xlu0 %277
    %v279 = vlaneseq
    %v280 = vshrl.u32 %v279, 7
    %v281 = vsub.s32 1, %v280
    %v282 = vrot.slane %v26, %v281
    %s284 = sor.u32 256, 32
    %285 = vbcast.lane.b32.xlu0 %v282, %s284
    %v286 = vpop.permute.xlu0 %285
    %v289 = vmul.f32 %v268, %v278
    %v290 = vmul.f32 %v270, %v286
    %293 = vset.pattern.permute.xlu0 0
    %294 = vperm.xlu0 %293, %v289
    %v295 = vpop.permute.xlu0 %294
    %296 = vset.pattern.permute.xlu0 0
    %297 = vperm.xlu0 %296, %v290
    %v298 = vpop.permute.xlu0 %297
    %v299 = vlaneseq
    %v300 = vshrl.u32 %v299, 7
    %v301 = vsub.s32 %v238, %v300
    %v302 = vrot.slane %v295, %v301
    %v303 = vlaneseq
    %v304 = vshrl.u32 %v303, 7
    %v305 = vsub.s32 %v238, %v304
    %v306 = vrot.slane %v298, %v305
    %v307 = vsel %vm247, %v306, %v302
    %v309 = vsel %vm250, %v307, 0.0
    %310 = vadd.xlane.f32.xlu0 %v309
    %v311 = vpop.xlane.xlu0 %310
    %v312 = vrcp.pop %v311
    %v314 = vlaneseq
    %v315 = vshrl.u32 %v314, 7
    %v316 = vsub.s32 0, %v315
    %v317 = vrot.slane %v312, %v316
    %v318 = vlaneseq
    %v319 = vshrl.u32 %v318, 7
    %v320 = vsub.s32 1, %v319
    %v321 = vrot.slane %v312, %v320
    %v324 = vmul.f32 %v289, %v317
    %v325 = vmul.f32 %v290, %v321
    %327 = vset.pattern.permute.xlu0 0
    %328 = vperm.xlu0 %327, %v324
    %v329 = vpop.permute.xlu0 %328
    %v330 = vlaneseq
    %v331 = vshrl.u32 %v330, 7
    %v332 = vsub.s32 %v238, %v331
    %v333 = vrot.slane %v329, %v332
    %vm334 = vcmask 64512
    %v335 = vsel %vm334, %v333, 0
    %337 = vmatprep.subr.mxu0 0.0
    %338 = vmatpush1.msra.mxu0 %v15
    %339 = vmatprep.subr.mxu0 0.0
    %340 = vmatpush1.msra.mxu0 0.0
    %341 = vmatprep.subr.mxu0 0.0
    %342 = vmatpush1.msra.mxu0 0.0
    %343 = vmatprep.subr.mxu0 0.0
    %344 = vmatpush1.msra.mxu0 0.0
    %345 = vmatprep.subr.mxu0 0.0
    %346 = vmatpush1.msra.mxu0 0.0
    %347 = vmatprep.subr.mxu0 0.0
    %348 = vmatpush1.msra.mxu0 0.0
    %349 = vmatprep.subr.mxu0 0.0
    %350 = vmatpush1.msra.mxu0 0.0
    %351 = vmatprep.subr.mxu0 0.0
    %352 = vmatpush1.msra.mxu0 0.0
    %353 = vmatprep.subr.mxu0 0.0
    %354 = vmatpush1.msra.mxu0 0.0
    %355 = vmatprep.subr.mxu0 0.0
    %356 = vmatpush1.msra.mxu0 0.0
    %357 = vmatprep.subr.mxu0 0.0
    %358 = vmatpush1.msra.mxu0 0.0
    %359 = vmatprep.subr.mxu0 0.0
    %360 = vmatpush1.msra.mxu0 0.0
    %361 = vmatprep.subr.mxu0 0.0
    %362 = vmatpush1.msra.mxu0 0.0
    %363 = vmatprep.subr.mxu0 0.0
    %364 = vmatpush1.msra.mxu0 0.0
    %365 = vmatprep.subr.mxu0 0.0
    %366 = vmatpush1.msra.mxu0 0.0
    %367 = vmatprep.subr.mxu0 0.0
    %368 = vmatpush1.msra.mxu0 0.0
    %369 = vmatprep.subr.mxu0 0.0
    %370 = vmatpush1.msra.mxu0 0.0
    %371 = vmatprep.subr.mxu0 0.0
    %372 = vmatpush1.msra.mxu0 0.0
    %373 = vmatprep.subr.mxu0 0.0
    %374 = vmatpush1.msra.mxu0 0.0
    %375 = vmatprep.subr.mxu0 0.0
    %376 = vmatpush1.msra.mxu0 0.0
    %377 = vmatprep.subr.mxu0 0.0
    %378 = vmatpush1.msra.mxu0 0.0
    %379 = vmatprep.subr.mxu0 0.0
    %380 = vmatpush1.msra.mxu0 0.0
    %381 = vmatprep.subr.mxu0 0.0
    %382 = vmatpush1.msra.mxu0 0.0
    %383 = vmatprep.subr.mxu0 0.0
    %384 = vmatpush1.msra.mxu0 0.0
    %385 = vmatprep.subr.mxu0 0.0
    %386 = vmatpush1.msra.mxu0 0.0
    %387 = vmatprep.subr.mxu0 0.0
    %388 = vmatpush1.msra.mxu0 0.0
    %389 = vmatprep.subr.mxu0 0.0
    %390 = vmatpush1.msra.mxu0 0.0
    %391 = vmatprep.subr.mxu0 0.0
    %392 = vmatpush1.msra.mxu0 0.0
    %393 = vmatprep.subr.mxu0 0.0
    %394 = vmatpush1.msra.mxu0 0.0
    %395 = vmatprep.subr.mxu0 0.0
    %396 = vmatpush1.msra.mxu0 0.0
    %397 = vmatprep.subr.mxu0 0.0
    %398 = vmatpush1.msra.mxu0 0.0
    %399 = vmatprep.subr.mxu0 0.0
    %400 = vmatpush1.msra.mxu0 0.0
    %401 = vmatprep.mubr.f32.mxu0 0.0
    %402 = vmatmul.mubr.f32.gmra.mrb[0].mxu0 %v335
    %v403 = vpop.f32.mrb[0].mxu0
    %v404 = vadd.f32 0.0, %v403
    %v405 = vpop.f32.mrb[0].mxu0
    %406 = vdwg.mxu0
    %408 = vset.pattern.permute.xlu0 0
    %409 = vperm.xlu0 %408, %v325
    %v410 = vpop.permute.xlu0 %409
    %v411 = vlaneseq
    %v412 = vshrl.u32 %v411, 7
    %v413 = vsub.s32 %v238, %v412
    %v414 = vrot.slane %v410, %v413
    %v415 = vsel %vm334, %v414, 0
    %417 = vmatprep.subr.mxu0 0.0
    %418 = vmatpush1.msra.mxu0 %v16
    %419 = vmatprep.subr.mxu0 0.0
    %420 = vmatpush1.msra.mxu0 0.0
    %421 = vmatprep.subr.mxu0 0.0
    %422 = vmatpush1.msra.mxu0 0.0
    %423 = vmatprep.subr.mxu0 0.0
    %424 = vmatpush1.msra.mxu0 0.0
    %425 = vmatprep.subr.mxu0 0.0
    %426 = vmatpush1.msra.mxu0 0.0
    %427 = vmatprep.subr.mxu0 0.0
    %428 = vmatpush1.msra.mxu0 0.0
    %429 = vmatprep.subr.mxu0 0.0
    %430 = vmatpush1.msra.mxu0 0.0
    %431 = vmatprep.subr.mxu0 0.0
    %432 = vmatpush1.msra.mxu0 0.0
    %433 = vmatprep.subr.mxu0 0.0
    %434 = vmatpush1.msra.mxu0 0.0
    %435 = vmatprep.subr.mxu0 0.0
    %436 = vmatpush1.msra.mxu0 0.0
    %437 = vmatprep.subr.mxu0 0.0
    %438 = vmatpush1.msra.mxu0 0.0
    %439 = vmatprep.subr.mxu0 0.0
    %440 = vmatpush1.msra.mxu0 0.0
    %441 = vmatprep.subr.mxu0 0.0
    %442 = vmatpush1.msra.mxu0 0.0
    %443 = vmatprep.subr.mxu0 0.0
    %444 = vmatpush1.msra.mxu0 0.0
    %445 = vmatprep.subr.mxu0 0.0
    %446 = vmatpush1.msra.mxu0 0.0
    %447 = vmatprep.subr.mxu0 0.0
    %448 = vmatpush1.msra.mxu0 0.0
    %449 = vmatprep.subr.mxu0 0.0
    %450 = vmatpush1.msra.mxu0 0.0
    %451 = vmatprep.subr.mxu0 0.0
    %452 = vmatpush1.msra.mxu0 0.0
    %453 = vmatprep.subr.mxu0 0.0
    %454 = vmatpush1.msra.mxu0 0.0
    %455 = vmatprep.subr.mxu0 0.0
    %456 = vmatpush1.msra.mxu0 0.0
    %457 = vmatprep.subr.mxu0 0.0
    %458 = vmatpush1.msra.mxu0 0.0
    %459 = vmatprep.subr.mxu0 0.0
    %460 = vmatpush1.msra.mxu0 0.0
    %461 = vmatprep.subr.mxu0 0.0
    %462 = vmatpush1.msra.mxu0 0.0
    %463 = vmatprep.subr.mxu0 0.0
    %464 = vmatpush1.msra.mxu0 0.0
    %465 = vmatprep.subr.mxu0 0.0
    %466 = vmatpush1.msra.mxu0 0.0
    %467 = vmatprep.subr.mxu0 0.0
    %468 = vmatpush1.msra.mxu0 0.0
    %469 = vmatprep.subr.mxu0 0.0
    %470 = vmatpush1.msra.mxu0 0.0
    %471 = vmatprep.subr.mxu0 0.0
    %472 = vmatpush1.msra.mxu0 0.0
    %473 = vmatprep.subr.mxu0 0.0
    %474 = vmatpush1.msra.mxu0 0.0
    %475 = vmatprep.subr.mxu0 0.0
    %476 = vmatpush1.msra.mxu0 0.0
    %477 = vmatprep.subr.mxu0 0.0
    %478 = vmatpush1.msra.mxu0 0.0
    %479 = vmatprep.subr.mxu0 0.0
    %480 = vmatpush1.msra.mxu0 0.0
    %481 = vmatprep.mubr.f32.mxu0 0.0
    %482 = vmatmul.mubr.f32.gmra.mrb[0].mxu0 %v415
    %v483 = vpop.f32.mrb[0].mxu0
    %v484 = vadd.f32 0.0, %v483
    %v485 = vpop.f32.mrb[0].mxu0
    %486 = vdwg.mxu0
    %v489 = vrot.slane %v484, 7
    %v490 = vsel %vm247, %v489, %v404
    %vm492 = vcmask 254976
    %493 = vst.msk [vmem:[#allocation2] sm:$0x3] %vm492, %v490
    %v494 = vadd.s32 %v238, 4294967264
    %v495 = vlaneseq
    %v496 = vshrl.u32 %v495, 7
    %v497 = vsub.s32 %v494, %v496
    %v498 = vrot.slane %v329, %v497
    %v499 = vlaneseq
    %v500 = vshrl.u32 %v499, 7
    %v501 = vsub.s32 %v494, %v500
    %v502 = vrot.slane %v410, %v501
    %v503 = vsel %vm247, %v502, %v498
    %vm505 = vcmask 320768
    %506 = vst.msk [vmem:[#allocation2] sm:$0x3] %vm505, %v503
    // Predicated region
    $region14: #{tpu_custom_call.1} parent=1 // pred_check
      _
    $region15: #{tpu_custom_call.1} parent=1 // pred_check_branch
      %508 = sbr.rel (0) target = $region17
    $region16: #{tpu_custom_call.1} parent=1 // pred_region
      %s510 = ssub.s32 32, 32
      %511 = vsyncadd [#allocation3], %s510
      %s513 = sshll.u32 [#allocation2], 4
      %s514 = int_to_ptr.vmem [resolvable:$true] %s513
      %516 = dma.vmem_to_hbm [thread:$0]  %s514, 32, %s3, [#allocation3]
    $region17: #{tpu_custom_call.1} parent=1 // pred_fallthru
      _
    // Predicated region
    $region18: #{tpu_custom_call.1} parent=1 // pred_check
      _
    $region19: #{tpu_custom_call.1} parent=1 // pred_check_branch
      %518 = sbr.rel (0) target = $region21
    $region20: #{tpu_custom_call.1} parent=1 // pred_region
      %519 = dma.done [#allocation3], 32
    $region21: #{tpu_custom_call.1} parent=1 // pred_fallthru
      _
    %520 = vsyncpa [#allocation3], 1

</llo_original>
